<compile_context>
chip_gen: v7x
topology: tpu7x:2x2x1
jax: 0.10.0
libtpu: 0.0.40
codegen_flags: <defaults>
</compile_context>

<pallas_src>
import jax
import jax.numpy as jnp
import numpy as np
from jax.experimental import pallas as pl
from jax.experimental.pallas import tpu as pltpu

N_RES_BLOCKS = 3  # Q2: _rho_0, _rho_1, _rho_2


# ----------------------------------------------------------------------------
# Kernel bodies (transposed, batch-on-lanes layout)
# ----------------------------------------------------------------------------
def _q2_mlp_t(x, w1_ref, b1_ref, w_res_ref, b_res_ref, w_out_ref, b_out_ref):
    """Fused MLP: input linear + 3 residual blocks + output linear.

    x: [n_input, tb] f32 (batch on lanes).  Weights are [out, in]; biases are
    [out, 1] (broadcast along lanes).  Returns q_t of shape [n_output, tb].
    """
    def dot(w, a):
        return jnp.dot(w, a, preferred_element_type=jnp.float32)

    # features1 = relu(h1(x))                                       [F, tb]
    f = jnp.maximum(dot(w1_ref[...], x) + b1_ref[...], 0.0)

    # 3 residual blocks (statically unrolled):
    #   f = relu( W2 @ relu(W1 @ f + b1) + b2 + f )
    for i in range(N_RES_BLOCKS):
        h = jnp.maximum(dot(w_res_ref[i, 0], f) + b_res_ref[i, 0], 0.0)
        h = dot(w_res_ref[i, 1], h) + b_res_ref[i, 1]
        f = jnp.maximum(h + f, 0.0)

    # output linear (LinearOutput == plain Linear)                  [n_out, tb]
    return dot(w_out_ref[...], f) + b_out_ref[...]


def q2_kernel(x_ref, w1_ref, b1_ref, w_res_ref, b_res_ref, w_out_ref,
              b_out_ref, q_ref):
    q_t = _q2_mlp_t(x_ref[...], w1_ref, b1_ref, w_res_ref, b_res_ref,
                    w_out_ref, b_out_ref)
    q_ref[...] = q_t.astype(q_ref.dtype)


def q2_gather_kernel(x_ref, action_ref, w1_ref, b1_ref, w_res_ref, b_res_ref,
                     w_out_ref, b_out_ref, qa_ref):
    q_t = _q2_mlp_t(x_ref[...], w1_ref, b1_ref, w_res_ref, b_res_ref,
                    w_out_ref, b_out_ref)
    # Fused q.gather(1, action): one-hot select over the tiny n_output axis
    # (rows / sublanes).  Output is a lane-dense [1, tb] slab.
    row = jax.lax.broadcasted_iota(jnp.int32, q_t.shape, 0)      # [n_out, tb]
    onehot = (row == action_ref[...]).astype(jnp.float32)        # [n_out, tb]
    qa_ref[...] = jnp.sum(q_t * onehot, axis=0, keepdims=True).astype(qa_ref.dtype)


# ----------------------------------------------------------------------------
# Wrapper
# ----------------------------------------------------------------------------
def _pick_batch_tile(B, max_batch_tile):
    """Batch (lane) tile: whole batch if tiny, otherwise lane-aligned tiles
    chosen so the grid has >= 2 steps (v7x megacore gets both TensorCores)."""
    if B <= 128:
        return B  # single whole-array block (full-dim block is always legal)
    cap = max(128, (max_batch_tile // 128) * 128)
    tb = min(cap, ((pl.cdiv(B, 2) + 127) // 128) * 128)
    return tb


def q2_forward(state, params, action=None, *, max_batch_tile=512):
    """Q2.forward. `state` is [B, 1, n_input]; `action` (optional) is [B, 1]."""
    # One-time layout transposes live here (wrapper), not in the kernel.
    x_t = jnp.squeeze(state, axis=1).astype(jnp.float32).T        # [n_input, B]
    n_input, B = x_t.shape
    n_output = params["w_out"].shape[0]

    tb = _pick_batch_tile(B, max_batch_tile)
    grid = (pl.cdiv(B, tb),)

    x_spec = pl.BlockSpec((n_input, tb), lambda i: (0, i))
    # Weights/biases: whole-array, grid-invariant blocks (resident).
    w_specs = [
        pl.BlockSpec(params["w1"].shape, lambda i: (0, 0)),
        pl.BlockSpec(params["b1"].shape, lambda i: (0, 0)),
        pl.BlockSpec(params["w_res"].shape, lambda i: (0, 0, 0, 0)),
        pl.BlockSpec(params["b_res"].shape, lambda i: (0, 0, 0, 0)),
        pl.BlockSpec(params["w_out"].shape, lambda i: (0, 0)),
        pl.BlockSpec(params["b_out"].shape, lambda i: (0, 0)),
    ]
    weight_args = (params["w1"], params["b1"], params["w_res"],
                   params["b_res"], params["w_out"], params["b_out"])
    cparams = pltpu.CompilerParams(dimension_semantics=("parallel",))

    if action is None:
        q_t = pl.pallas_call(
            q2_kernel,
            out_shape=jax.ShapeDtypeStruct((n_output, B), jnp.float32),
            grid=grid,
            in_specs=[x_spec] + w_specs,
            out_specs=pl.BlockSpec((n_output, tb), lambda i: (0, i)),
            compiler_params=cparams,
        )(x_t, *weight_args)
        return q_t.T                                               # [B, n_output]

    # action path: gather fused inside the kernel, lane-dense [1, B] output.
    action_t = action.astype(jnp.int32).reshape(1, B)              # [1, B]
    a_spec = pl.BlockSpec((1, tb), lambda i: (0, i))
    qa_t = pl.pallas_call(
        q2_gather_kernel,
        out_shape=jax.ShapeDtypeStruct((1, B), jnp.float32),
        grid=grid,
        in_specs=[x_spec, a_spec] + w_specs,
        out_specs=pl.BlockSpec((1, tb), lambda i: (0, i)),
        compiler_params=cparams,
    )(x_t, action_t, *weight_args)
    # torch.squeeze(q.gather(1, action)): drop the gathered column dim only,
    # so a batch of 1 still returns a 1-D array (documented deviation).
    return qa_t[0]


# ----------------------------------------------------------------------------
# Parameter init (xavier_uniform like the PyTorch module), all f32,
# weights stored [out, in] (PyTorch Linear layout), biases [out, 1].
# ----------------------------------------------------------------------------
def _xavier_uniform(key, out_dim, in_dim, gain=1.0):
    limit = gain * np.sqrt(6.0 / (in_dim + out_dim))
    return jax.random.uniform(key, (out_dim, in_dim), jnp.float32, -limit, limit)


def _linear_bias(key, fan_in, out_dim):
    bound = 1.0 / np.sqrt(fan_in)
    return jax.random.uniform(key, (out_dim, 1), jnp.float32, -bound, bound)


def init_q2_params(key, n_input, n_features, n_output):
    relu_gain = float(np.sqrt(2.0))  # nn.init.calculate_gain('relu')
    kw = jax.random.split(key, 2 * N_RES_BLOCKS + 2)
    kb = jax.random.split(jax.random.fold_in(key, 1), 2 * N_RES_BLOCKS + 2)

    w1 = _xavier_uniform(kw[0], n_features, n_input, relu_gain)
    b1 = _linear_bias(kb[0], n_input, n_features)
    wa = [_xavier_uniform(kw[1 + 2 * i], n_features, n_features, relu_gain)
          for i in range(N_RES_BLOCKS)]
    wb = [_xavier_uniform(kw[2 + 2 * i], n_features, n_features, relu_gain)
          for i in range(N_RES_BLOCKS)]
    ba = [_linear_bias(kb[1 + 2 * i], n_features, n_features)
          for i in range(N_RES_BLOCKS)]
    bb = [_linear_bias(kb[2 + 2 * i], n_features, n_features)
          for i in range(N_RES_BLOCKS)]
    w_out = _xavier_uniform(kw[-1], n_output, n_features, 1.0)
    b_out = _linear_bias(kb[-1], n_features, n_output)

    # Stack residual-block weights/biases: [n_blocks, 2(=first/second), ...]
    w_res = jnp.stack([jnp.stack([wa[i], wb[i]]) for i in range(N_RES_BLOCKS)])
    b_res = jnp.stack([jnp.stack([ba[i], bb[i]]) for i in range(N_RES_BLOCKS)])

    return dict(w1=w1, b1=b1, w_res=w_res, b_res=b_res,
                w_out=w_out, b_out=b_out)


# ----------------------------------------------------------------------------
# Independent numpy f32 reference (batch-major, standard Linear semantics)
# ----------------------------------------------------------------------------
def q2_reference_np(state, params, action=None):
    x = np.asarray(jnp.squeeze(state, axis=1), np.float32)
    w1 = np.asarray(params["w1"]); b1 = np.asarray(params["b1"])[:, 0]
    w_res = np.asarray(params["w_res"]); b_res = np.asarray(params["b_res"])
    w_out = np.asarray(params["w_out"]); b_out = np.asarray(params["b_out"])[:, 0]

    f = np.maximum(x @ w1.T + b1, 0.0)
    for i in range(N_RES_BLOCKS):
        h = np.maximum(f @ w_res[i, 0].T + b_res[i, 0][:, 0], 0.0)
        h = h @ w_res[i, 1].T + b_res[i, 1][:, 0]
        f = np.maximum(h + f, 0.0)
    q = f @ w_out.T + b_out
    if action is None:
        return q
    a = np.asarray(action).reshape(-1).astype(np.int64)
    return q[np.arange(q.shape[0]), a]


# ----------------------------------------------------------------------------
# Demo / smoke test
# ----------------------------------------------------------------------------
if __name__ == "__main__":
    # Shapes consistent with the module: input_shape=(4,), output_shape=(4,),
    # n_features=32, batch=2; state carries a singleton dim 1 (squeezed in forward).
    batch, n_input, n_features, n_output = 2, 4, 32, 4
    TOL = dict(atol=5e-2, rtol=5e-2)  # covers default MXU matmul precision

    key = jax.random.PRNGKey(0)
    k_state, k_params, k_act, k_big = jax.random.split(key, 4)

    state = jax.random.normal(k_state, (batch, 1, n_input), dtype=jnp.float32)
    params = init_q2_params(k_params, n_input, n_features, n_output)

    # Path 1: action is None -> full Q values [batch, n_output]
    q = jax.block_until_ready(q2_forward(state, params))
    assert q.shape == (batch, n_output)
    assert np.allclose(np.asarray(q), q2_reference_np(state, params), **TOL)

    # Path 2: action provided -> gathered Q values [batch] (gather fused)
    action = jax.random.randint(k_act, (batch, 1), 0, n_output)
    q_acted = jax.block_until_ready(q2_forward(state, params, action=action))
    assert q_acted.shape == (batch,)
    assert np.allclose(np.asarray(q_acted),
                       q2_reference_np(state, params, action=action), **TOL)
    # Internal consistency: fused gather matches gathering the full-q output.
    expected = jnp.take_along_axis(q, action.astype(jnp.int32), axis=1)[:, 0]
    assert jnp.allclose(q_acted, expected, atol=1e-5, rtol=1e-5)

    # Large-batch / gridded path: B=1024 -> tb=512, grid=(2,) on the
    # "parallel" axis (both v7x TensorCores get a step).
    big_B = 1024
    big_state = jax.random.normal(k_big, (big_B, 1, n_input), dtype=jnp.float32)
    big_action = jax.random.randint(k_act, (big_B, 1), 0, n_output)
    q_big = jax.block_until_ready(q2_forward(big_state, params))
    qa_big = jax.block_until_ready(q2_forward(big_state, params,
                                              action=big_action))
    assert q_big.shape == (big_B, n_output) and qa_big.shape == (big_B,)
    assert np.allclose(np.asarray(q_big), q2_reference_np(big_state, params),
                       **TOL)
    assert np.allclose(np.asarray(qa_big),
                       q2_reference_np(big_state, params, action=big_action),
                       **TOL)

    print("KERNEL_OK")
</pallas_src>

<mosaic_0001>
module attributes {stable_mosaic.version = 11 : i64} {
  func.func @q2_kernel(%arg0: i32, %arg1: memref<4x2xf32, #tpu.memory_space<vmem>>, %arg2: memref<32x4xf32, #tpu.memory_space<vmem>>, %arg3: memref<32x1xf32, #tpu.memory_space<vmem>>, %arg4: memref<3x2x32x32xf32, #tpu.memory_space<vmem>>, %arg5: memref<3x2x32x1xf32, #tpu.memory_space<vmem>>, %arg6: memref<4x32xf32, #tpu.memory_space<vmem>>, %arg7: memref<4x1xf32, #tpu.memory_space<vmem>>, %arg8: memref<4x2xf32, #tpu.memory_space<vmem>>) attributes {dimension_semantics = [#tpu.dimension_semantics<parallel>], iteration_bounds = array<i64: 1>, scalar_prefetch = 0 : i64, scratch_operands = 0 : i64, tpu.core_type = #tpu.core_type<tc>, window_params = [{transform_indices = @transform_0, window_bounds = array<i64: 4, 2>}, {pipeline_mode = #tpu.pipeline_mode<synchronous>, transform_indices = @transform_1, window_bounds = array<i64: 32, 4>}, {pipeline_mode = #tpu.pipeline_mode<synchronous>, transform_indices = @transform_2, window_bounds = array<i64: 32, 1>}, {pipeline_mode = #tpu.pipeline_mode<synchronous>, transform_indices = @transform_3, window_bounds = array<i64: 3, 2, 32, 32>}, {pipeline_mode = #tpu.pipeline_mode<synchronous>, transform_indices = @transform_4, window_bounds = array<i64: 3, 2, 32, 1>}, {pipeline_mode = #tpu.pipeline_mode<synchronous>, transform_indices = @transform_5, window_bounds = array<i64: 4, 32>}, {pipeline_mode = #tpu.pipeline_mode<synchronous>, transform_indices = @transform_6, window_bounds = array<i64: 4, 1>}, {transform_indices = @transform_7, window_bounds = array<i64: 4, 2>}]} {
    %c0 = arith.constant 0 : index
    %c0_0 = arith.constant 0 : index
    %0 = vector.load %arg1[%c0, %c0_0] : memref<4x2xf32, #tpu.memory_space<vmem>>, vector<4x2xf32>
    %c0_1 = arith.constant 0 : index
    %c0_2 = arith.constant 0 : index
    %1 = vector.load %arg2[%c0_1, %c0_2] : memref<32x4xf32, #tpu.memory_space<vmem>>, vector<32x4xf32>
    %cst = arith.constant dense<0.000000e+00> : vector<32x2xf32>
    %2 = tpu.matmul %1, %0, %cst {dimension_numbers = #tpu.dot_dimension_numbers<[1], [0], [0], [1], [0, 0, 1, 1], [], []>} : vector<32x4xf32>, vector<4x2xf32>, vector<32x2xf32> -> vector<32x2xf32>
    %c0_3 = arith.constant 0 : index
    %c0_4 = arith.constant 0 : index
    %3 = vector.load %arg3[%c0_3, %c0_4] : memref<32x1xf32, #tpu.memory_space<vmem>>, vector<32x1xf32>
    %4 = vector.broadcast %3 : vector<32x1xf32> to vector<32x2xf32>
    %5 = arith.addf %2, %4 : vector<32x2xf32>
    %cst_5 = arith.constant 0.000000e+00 : f32
    %6 = vector.broadcast %cst_5 : f32 to vector<32x2xf32>
    %7 = arith.maximumf %5, %6 : vector<32x2xf32>
    %c0_6 = arith.constant 0 : index
    %c0_7 = arith.constant 0 : index
    %c0_8 = arith.constant 0 : index
    %c0_9 = arith.constant 0 : index
    %8 = vector.load %arg4[%c0_6, %c0_7, %c0_8, %c0_9] : memref<3x2x32x32xf32, #tpu.memory_space<vmem>>, vector<1x1x32x32xf32>
    %9 = vector.shape_cast %8 : vector<1x1x32x32xf32> to vector<32x32xf32>
    %cst_10 = arith.constant dense<0.000000e+00> : vector<32x2xf32>
    %10 = tpu.matmul %9, %7, %cst_10 {dimension_numbers = #tpu.dot_dimension_numbers<[1], [0], [0], [1], [0, 0, 1, 1], [], []>} : vector<32x32xf32>, vector<32x2xf32>, vector<32x2xf32> -> vector<32x2xf32>
    %c0_11 = arith.constant 0 : index
    %c0_12 = arith.constant 0 : index
    %c0_13 = arith.constant 0 : index
    %c0_14 = arith.constant 0 : index
    %11 = vector.load %arg5[%c0_11, %c0_12, %c0_13, %c0_14] : memref<3x2x32x1xf32, #tpu.memory_space<vmem>>, vector<1x1x32x1xf32>
    %12 = vector.shape_cast %11 : vector<1x1x32x1xf32> to vector<32x1xf32>
    %13 = vector.broadcast %12 : vector<32x1xf32> to vector<32x2xf32>
    %14 = arith.addf %10, %13 : vector<32x2xf32>
    %cst_15 = arith.constant 0.000000e+00 : f32
    %15 = vector.broadcast %cst_15 : f32 to vector<32x2xf32>
    %16 = arith.maximumf %14, %15 : vector<32x2xf32>
    %c0_16 = arith.constant 0 : index
    %c1 = arith.constant 1 : index
    %c0_17 = arith.constant 0 : index
    %c0_18 = arith.constant 0 : index
    %17 = vector.load %arg4[%c0_16, %c1, %c0_17, %c0_18] : memref<3x2x32x32xf32, #tpu.memory_space<vmem>>, vector<1x1x32x32xf32>
    %18 = vector.shape_cast %17 : vector<1x1x32x32xf32> to vector<32x32xf32>
    %cst_19 = arith.constant dense<0.000000e+00> : vector<32x2xf32>
    %19 = tpu.matmul %18, %16, %cst_19 {dimension_numbers = #tpu.dot_dimension_numbers<[1], [0], [0], [1], [0, 0, 1, 1], [], []>} : vector<32x32xf32>, vector<32x2xf32>, vector<32x2xf32> -> vector<32x2xf32>
    %c0_20 = arith.constant 0 : index
    %c1_21 = arith.constant 1 : index
    %c0_22 = arith.constant 0 : index
    %c0_23 = arith.constant 0 : index
    %20 = vector.load %arg5[%c0_20, %c1_21, %c0_22, %c0_23] : memref<3x2x32x1xf32, #tpu.memory_space<vmem>>, vector<1x1x32x1xf32>
    %21 = vector.shape_cast %20 : vector<1x1x32x1xf32> to vector<32x1xf32>
    %22 = vector.broadcast %21 : vector<32x1xf32> to vector<32x2xf32>
    %23 = arith.addf %19, %22 : vector<32x2xf32>
    %24 = arith.addf %23, %7 : vector<32x2xf32>
    %cst_24 = arith.constant 0.000000e+00 : f32
    %25 = vector.broadcast %cst_24 : f32 to vector<32x2xf32>
    %26 = arith.maximumf %24, %25 : vector<32x2xf32>
    %c1_25 = arith.constant 1 : index
    %c0_26 = arith.constant 0 : index
    %c0_27 = arith.constant 0 : index
    %c0_28 = arith.constant 0 : index
    %27 = vector.load %arg4[%c1_25, %c0_26, %c0_27, %c0_28] : memref<3x2x32x32xf32, #tpu.memory_space<vmem>>, vector<1x1x32x32xf32>
    %28 = vector.shape_cast %27 : vector<1x1x32x32xf32> to vector<32x32xf32>
    %cst_29 = arith.constant dense<0.000000e+00> : vector<32x2xf32>
    %29 = tpu.matmul %28, %26, %cst_29 {dimension_numbers = #tpu.dot_dimension_numbers<[1], [0], [0], [1], [0, 0, 1, 1], [], []>} : vector<32x32xf32>, vector<32x2xf32>, vector<32x2xf32> -> vector<32x2xf32>
    %c1_30 = arith.constant 1 : index
    %c0_31 = arith.constant 0 : index
    %c0_32 = arith.constant 0 : index
    %c0_33 = arith.constant 0 : index
    %30 = vector.load %arg5[%c1_30, %c0_31, %c0_32, %c0_33] : memref<3x2x32x1xf32, #tpu.memory_space<vmem>>, vector<1x1x32x1xf32>
    %31 = vector.shape_cast %30 : vector<1x1x32x1xf32> to vector<32x1xf32>
    %32 = vector.broadcast %31 : vector<32x1xf32> to vector<32x2xf32>
    %33 = arith.addf %29, %32 : vector<32x2xf32>
    %cst_34 = arith.constant 0.000000e+00 : f32
    %34 = vector.broadcast %cst_34 : f32 to vector<32x2xf32>
    %35 = arith.maximumf %33, %34 : vector<32x2xf32>
    %c1_35 = arith.constant 1 : index
    %c1_36 = arith.constant 1 : index
    %c0_37 = arith.constant 0 : index
    %c0_38 = arith.constant 0 : index
    %36 = vector.load %arg4[%c1_35, %c1_36, %c0_37, %c0_38] : memref<3x2x32x32xf32, #tpu.memory_space<vmem>>, vector<1x1x32x32xf32>
    %37 = vector.shape_cast %36 : vector<1x1x32x32xf32> to vector<32x32xf32>
    %cst_39 = arith.constant dense<0.000000e+00> : vector<32x2xf32>
    %38 = tpu.matmul %37, %35, %cst_39 {dimension_numbers = #tpu.dot_dimension_numbers<[1], [0], [0], [1], [0, 0, 1, 1], [], []>} : vector<32x32xf32>, vector<32x2xf32>, vector<32x2xf32> -> vector<32x2xf32>
    %c1_40 = arith.constant 1 : index
    %c1_41 = arith.constant 1 : index
    %c0_42 = arith.constant 0 : index
    %c0_43 = arith.constant 0 : index
    %39 = vector.load %arg5[%c1_40, %c1_41, %c0_42, %c0_43] : memref<3x2x32x1xf32, #tpu.memory_space<vmem>>, vector<1x1x32x1xf32>
    %40 = vector.shape_cast %39 : vector<1x1x32x1xf32> to vector<32x1xf32>
    %41 = vector.broadcast %40 : vector<32x1xf32> to vector<32x2xf32>
    %42 = arith.addf %38, %41 : vector<32x2xf32>
    %43 = arith.addf %42, %26 : vector<32x2xf32>
    %cst_44 = arith.constant 0.000000e+00 : f32
    %44 = vector.broadcast %cst_44 : f32 to vector<32x2xf32>
    %45 = arith.maximumf %43, %44 : vector<32x2xf32>
    %c2 = arith.constant 2 : index
    %c0_45 = arith.constant 0 : index
    %c0_46 = arith.constant 0 : index
    %c0_47 = arith.constant 0 : index
    %46 = vector.load %arg4[%c2, %c0_45, %c0_46, %c0_47] : memref<3x2x32x32xf32, #tpu.memory_space<vmem>>, vector<1x1x32x32xf32>
    %47 = vector.shape_cast %46 : vector<1x1x32x32xf32> to vector<32x32xf32>
    %cst_48 = arith.constant dense<0.000000e+00> : vector<32x2xf32>
    %48 = tpu.matmul %47, %45, %cst_48 {dimension_numbers = #tpu.dot_dimension_numbers<[1], [0], [0], [1], [0, 0, 1, 1], [], []>} : vector<32x32xf32>, vector<32x2xf32>, vector<32x2xf32> -> vector<32x2xf32>
    %c2_49 = arith.constant 2 : index
    %c0_50 = arith.constant 0 : index
    %c0_51 = arith.constant 0 : index
    %c0_52 = arith.constant 0 : index
    %49 = vector.load %arg5[%c2_49, %c0_50, %c0_51, %c0_52] : memref<3x2x32x1xf32, #tpu.memory_space<vmem>>, vector<1x1x32x1xf32>
    %50 = vector.shape_cast %49 : vector<1x1x32x1xf32> to vector<32x1xf32>
    %51 = vector.broadcast %50 : vector<32x1xf32> to vector<32x2xf32>
    %52 = arith.addf %48, %51 : vector<32x2xf32>
    %cst_53 = arith.constant 0.000000e+00 : f32
    %53 = vector.broadcast %cst_53 : f32 to vector<32x2xf32>
    %54 = arith.maximumf %52, %53 : vector<32x2xf32>
    %c2_54 = arith.constant 2 : index
    %c1_55 = arith.constant 1 : index
    %c0_56 = arith.constant 0 : index
    %c0_57 = arith.constant 0 : index
    %55 = vector.load %arg4[%c2_54, %c1_55, %c0_56, %c0_57] : memref<3x2x32x32xf32, #tpu.memory_space<vmem>>, vector<1x1x32x32xf32>
    %56 = vector.shape_cast %55 : vector<1x1x32x32xf32> to vector<32x32xf32>
    %cst_58 = arith.constant dense<0.000000e+00> : vector<32x2xf32>
    %57 = tpu.matmul %56, %54, %cst_58 {dimension_numbers = #tpu.dot_dimension_numbers<[1], [0], [0], [1], [0, 0, 1, 1], [], []>} : vector<32x32xf32>, vector<32x2xf32>, vector<32x2xf32> -> vector<32x2xf32>
    %c2_59 = arith.constant 2 : index
    %c1_60 = arith.constant 1 : index
    %c0_61 = arith.constant 0 : index
    %c0_62 = arith.constant 0 : index
    %58 = vector.load %arg5[%c2_59, %c1_60, %c0_61, %c0_62] : memref<3x2x32x1xf32, #tpu.memory_space<vmem>>, vector<1x1x32x1xf32>
    %59 = vector.shape_cast %58 : vector<1x1x32x1xf32> to vector<32x1xf32>
    %60 = vector.broadcast %59 : vector<32x1xf32> to vector<32x2xf32>
    %61 = arith.addf %57, %60 : vector<32x2xf32>
    %62 = arith.addf %61, %45 : vector<32x2xf32>
    %cst_63 = arith.constant 0.000000e+00 : f32
    %63 = vector.broadcast %cst_63 : f32 to vector<32x2xf32>
    %64 = arith.maximumf %62, %63 : vector<32x2xf32>
    %c0_64 = arith.constant 0 : index
    %c0_65 = arith.constant 0 : index
    %65 = vector.load %arg6[%c0_64, %c0_65] : memref<4x32xf32, #tpu.memory_space<vmem>>, vector<4x32xf32>
    %cst_66 = arith.constant dense<0.000000e+00> : vector<4x2xf32>
    %66 = tpu.matmul %65, %64, %cst_66 {dimension_numbers = #tpu.dot_dimension_numbers<[1], [0], [0], [1], [0, 0, 1, 1], [], []>} : vector<4x32xf32>, vector<32x2xf32>, vector<4x2xf32> -> vector<4x2xf32>
    %c0_67 = arith.constant 0 : index
    %c0_68 = arith.constant 0 : index
    %67 = vector.load %arg7[%c0_67, %c0_68] : memref<4x1xf32, #tpu.memory_space<vmem>>, vector<4x1xf32>
    %68 = vector.broadcast %67 : vector<4x1xf32> to vector<4x2xf32>
    %69 = arith.addf %66, %68 : vector<4x2xf32>
    %c0_69 = arith.constant 0 : index
    %c0_70 = arith.constant 0 : index
    %70 = vector.load %arg8[%c0_69, %c0_70] : memref<4x2xf32, #tpu.memory_space<vmem>>, vector<4x2xf32>
    tpu.vector_store %arg8[%c0_69, %c0_70], %69 {strides = array<i32>} : memref<4x2xf32, #tpu.memory_space<vmem>>, vector<4x2xf32>,
    return
  }
  func.func @transform_0(%arg0: i32) -> (i32, i32) {
    %c0_i32 = arith.constant 0 : i32
    %c0_i32_0 = arith.constant 0 : i32
    return %c0_i32, %arg0 : i32, i32
  }
  func.func @transform_1(%arg0: i32) -> (i32, i32) {
    %c0_i32 = arith.constant 0 : i32
    %c0_i32_0 = arith.constant 0 : i32
    %c0_i32_1 = arith.constant 0 : i32
    return %c0_i32, %c0_i32_0 : i32, i32
  }
  func.func @transform_2(%arg0: i32) -> (i32, i32) {
    %c0_i32 = arith.constant 0 : i32
    %c0_i32_0 = arith.constant 0 : i32
    %c0_i32_1 = arith.constant 0 : i32
    return %c0_i32, %c0_i32_0 : i32, i32
  }
  func.func @transform_3(%arg0: i32) -> (i32, i32, i32, i32) {
    %c0_i32 = arith.constant 0 : i32
    %c0_i32_0 = arith.constant 0 : i32
    %c0_i32_1 = arith.constant 0 : i32
    %c0_i32_2 = arith.constant 0 : i32
    %c0_i32_3 = arith.constant 0 : i32
    return %c0_i32, %c0_i32_0, %c0_i32_1, %c0_i32_2 : i32, i32, i32, i32
  }
  func.func @transform_4(%arg0: i32) -> (i32, i32, i32, i32) {
    %c0_i32 = arith.constant 0 : i32
    %c0_i32_0 = arith.constant 0 : i32
    %c0_i32_1 = arith.constant 0 : i32
    %c0_i32_2 = arith.constant 0 : i32
    %c0_i32_3 = arith.constant 0 : i32
    return %c0_i32, %c0_i32_0, %c0_i32_1, %c0_i32_2 : i32, i32, i32, i32
  }
  func.func @transform_5(%arg0: i32) -> (i32, i32) {
    %c0_i32 = arith.constant 0 : i32
    %c0_i32_0 = arith.constant 0 : i32
    %c0_i32_1 = arith.constant 0 : i32
    return %c0_i32, %c0_i32_0 : i32, i32
  }
  func.func @transform_6(%arg0: i32) -> (i32, i32) {
    %c0_i32 = arith.constant 0 : i32
    %c0_i32_0 = arith.constant 0 : i32
    %c0_i32_1 = arith.constant 0 : i32
    return %c0_i32, %c0_i32_0 : i32, i32
  }
  func.func @transform_7(%arg0: i32) -> (i32, i32) {
    %c0_i32 = arith.constant 0 : i32
    %c0_i32_0 = arith.constant 0 : i32
    return %c0_i32, %arg0 : i32, i32
  }
}

</mosaic_0001>

<llo_original>
// kernel: tpu_custom_call.1
$region0: #{tpu_custom_call.1}
  #allocation0 [shape = 'u32[]', space=smem, size = 0x4, offset = 0x4, fixed_abs, tag = 'smem constant byte address 0x4 - core index']
  #allocation1 [shape = 'u32[144,128]{1,0:T(1,128)}', space=vmem, size = 0x12000, scoped, tag = 'internal scratch']
  %s0 = inlined_call_operand.vmem [shape: f32[4,2], index: 0, kind: input, shape index: {}]
  %s1 = inlined_call_operand.vmem [shape: f32[32,4], index: 1, kind: input, shape index: {}]
  %s2 = inlined_call_operand.vmem [shape: f32[32,1], index: 2, kind: input, shape index: {}]
  %s3 = inlined_call_operand.vmem [shape: f32[3,2,32,32], index: 3, kind: input, shape index: {}]
  %s4 = inlined_call_operand.vmem [shape: f32[3,2,32,1], index: 4, kind: input, shape index: {}]
  %s5 = inlined_call_operand.vmem [shape: f32[4,32], index: 5, kind: input, shape index: {}]
  %s6 = inlined_call_operand.vmem [shape: f32[4,1], index: 6, kind: input, shape index: {}]
  %s7 = inlined_call_operand.vmem [shape: f32[4,2], index: 7, kind: output, shape index: {}]
  %s8 = sld [smem:[#allocation0]]
  $region38: #{tpu_custom_call.1} parent=0
    _
  %s10 = ssub.s32 1, %s8
  %s11 = scalar_select 0, %s10, %s8
  // Predicated region
  $region2: #{tpu_custom_call.1} parent=0 // pred_check
    _
  $region3: #{tpu_custom_call.1} parent=0 // pred_check_branch
    %13 = sbr.rel (0) target = $region5
  $region4: #{tpu_custom_call.1} parent=0 // pred_region
    _
  $region5: #{tpu_custom_call.1} parent=0 // pred_fallthru
    _
  // Predicated region
  $region6: #{tpu_custom_call.1} parent=0 // pred_check
    _
  $region7: #{tpu_custom_call.1} parent=0 // pred_check_branch
    %15 = sbr.rel (0) target = $region9
  $region8: #{tpu_custom_call.1} parent=0 // pred_region
    _
  $region9: #{tpu_custom_call.1} parent=0 // pred_fallthru
    _
  // Predicated region
  $region10: #{tpu_custom_call.1} parent=0 // pred_check
    _
  $region11: #{tpu_custom_call.1} parent=0 // pred_check_branch
    %17 = sbr.rel (0) target = $region13
  $region12: #{tpu_custom_call.1} parent=0 // pred_region
    _
  $region13: #{tpu_custom_call.1} parent=0 // pred_fallthru
    _
  // Predicated region
  $region14: #{tpu_custom_call.1} parent=0 // pred_check
    _
  $region15: #{tpu_custom_call.1} parent=0 // pred_check_branch
    %19 = sbr.rel (0) target = $region17
  $region16: #{tpu_custom_call.1} parent=0 // pred_region
    _
  $region17: #{tpu_custom_call.1} parent=0 // pred_fallthru
    _
  // Predicated region
  $region18: #{tpu_custom_call.1} parent=0 // pred_check
    _
  $region19: #{tpu_custom_call.1} parent=0 // pred_check_branch
    %21 = sbr.rel (0) target = $region21
  $region20: #{tpu_custom_call.1} parent=0 // pred_region
    _
  $region21: #{tpu_custom_call.1} parent=0 // pred_fallthru
    _
  // Predicated region
  $region22: #{tpu_custom_call.1} parent=0 // pred_check
    _
  $region23: #{tpu_custom_call.1} parent=0 // pred_check_branch
    %23 = sbr.rel (0) target = $region25
  $region24: #{tpu_custom_call.1} parent=0 // pred_region
    _
  $region25: #{tpu_custom_call.1} parent=0 // pred_fallthru
    _
  // Predicated region
  $region26: #{tpu_custom_call.1} parent=0 // pred_check
    _
  $region27: #{tpu_custom_call.1} parent=0 // pred_check_branch
    %25 = sbr.rel (0) target = $region29
  $region28: #{tpu_custom_call.1} parent=0 // pred_region
    _
  $region29: #{tpu_custom_call.1} parent=0 // pred_fallthru
    _
  %v26 = vld [vmem:[%s0] sm:$0xf]
  %v27 = vld [vmem:[%s1] sm:$0xff]
  %v28 = vld [vmem:[%s1 + $0x8] sm:$0xff]
  %v29 = vld [vmem:[%s1 + $0x10] sm:$0xff]
  %v30 = vld [vmem:[%s1 + $0x18] sm:$0xff]
  %v31 = vld [vmem:[%s2] sm:$0xff]
  %v32 = vld [vmem:[%s2 + $0x8] sm:$0xff]
  %v33 = vld [vmem:[%s2 + $0x10] sm:$0xff]
  %v34 = vld [vmem:[%s2 + $0x18] sm:$0xff]
  %36 = vset.pattern.permute.xlu0 0
  %37 = vperm.xlu0 %36, %v31
  %v38 = vpop.permute.xlu0 %37
  %41 = vset.pattern.permute.xlu0 0
  %42 = vperm.xlu0 %41, %v32
  %v43 = vpop.permute.xlu0 %42
  %46 = vset.pattern.permute.xlu0 0
  %47 = vperm.xlu0 %46, %v33
  %v48 = vpop.permute.xlu0 %47
  %51 = vset.pattern.permute.xlu0 0
  %52 = vperm.xlu0 %51, %v34
  %v53 = vpop.permute.xlu0 %52
  %vm55 = vcmask 31744
  %v57 = vsel %vm55, %v27, 0
  %v60 = vsel %vm55, %v28, 0
  %v63 = vsel %vm55, %v29, 0
  %v66 = vsel %vm55, %v30, 0
  %vm68 = vcmask 1043456
  %v70 = vsel %vm68, %v26, 0
  %72 = vmatprep.subr.mxu0 0.0
  %73 = vmatpush1.msra.mxu0 %v70
  %74 = vmatprep.subr.mxu0 0.0
  %75 = vmatpush1.msra.mxu0 0.0
  %76 = vmatprep.subr.mxu0 0.0
  %77 = vmatpush1.msra.mxu0 0.0
  %78 = vmatprep.subr.mxu0 0.0
  %79 = vmatpush1.msra.mxu0 0.0
  %80 = vmatprep.subr.mxu0 0.0
  %81 = vmatpush1.msra.mxu0 0.0
  %82 = vmatprep.subr.mxu0 0.0
  %83 = vmatpush1.msra.mxu0 0.0
  %84 = vmatprep.subr.mxu0 0.0
  %85 = vmatpush1.msra.mxu0 0.0
  %86 = vmatprep.subr.mxu0 0.0
  %87 = vmatpush1.msra.mxu0 0.0
  %88 = vmatprep.subr.mxu0 0.0
  %89 = vmatpush1.msra.mxu0 0.0
  %90 = vmatprep.subr.mxu0 0.0
  %91 = vmatpush1.msra.mxu0 0.0
  %92 = vmatprep.subr.mxu0 0.0
  %93 = vmatpush1.msra.mxu0 0.0
  %94 = vmatprep.subr.mxu0 0.0
  %95 = vmatpush1.msra.mxu0 0.0
  %96 = vmatprep.subr.mxu0 0.0
  %97 = vmatpush1.msra.mxu0 0.0
  %98 = vmatprep.subr.mxu0 0.0
  %99 = vmatpush1.msra.mxu0 0.0
  %100 = vmatprep.subr.mxu0 0.0
  %101 = vmatpush1.msra.mxu0 0.0
  %102 = vmatprep.subr.mxu0 0.0
  %103 = vmatpush1.msra.mxu0 0.0
  %104 = vmatprep.subr.mxu0 0.0
  %105 = vmatpush1.msra.mxu0 0.0
  %106 = vmatprep.subr.mxu0 0.0
  %107 = vmatpush1.msra.mxu0 0.0
  %108 = vmatprep.subr.mxu0 0.0
  %109 = vmatpush1.msra.mxu0 0.0
  %110 = vmatprep.subr.mxu0 0.0
  %111 = vmatpush1.msra.mxu0 0.0
  %112 = vmatprep.subr.mxu0 0.0
  %113 = vmatpush1.msra.mxu0 0.0
  %114 = vmatprep.subr.mxu0 0.0
  %115 = vmatpush1.msra.mxu0 0.0
  %116 = vmatprep.subr.mxu0 0.0
  %117 = vmatpush1.msra.mxu0 0.0
  %118 = vmatprep.subr.mxu0 0.0
  %119 = vmatpush1.msra.mxu0 0.0
  %120 = vmatprep.subr.mxu0 0.0
  %121 = vmatpush1.msra.mxu0 0.0
  %122 = vmatprep.subr.mxu0 0.0
  %123 = vmatpush1.msra.mxu0 0.0
  %124 = vmatprep.subr.mxu0 0.0
  %125 = vmatpush1.msra.mxu0 0.0
  %126 = vmatprep.subr.mxu0 0.0
  %127 = vmatpush1.msra.mxu0 0.0
  %128 = vmatprep.subr.mxu0 0.0
  %129 = vmatpush1.msra.mxu0 0.0
  %130 = vmatprep.subr.mxu0 0.0
  %131 = vmatpush1.msra.mxu0 0.0
  %132 = vmatprep.subr.mxu0 0.0
  %133 = vmatpush1.msra.mxu0 0.0
  %134 = vmatprep.subr.mxu0 0.0
  %135 = vmatpush1.msra.mxu0 0.0
  %136 = vmatprep.mubr.f32.mxu0 0.0
  %137 = vmatmul.mubr.f32.gmra.mrb[0].mxu0 %v57
  %v138 = vpop.f32.mrb[0].mxu0
  %v139 = vadd.f32 %v38, %v138
  %v140 = vpop.f32.mrb[0].mxu0
  %141 = vmatprep.mubr.f32.mxu0 0.0
  %142 = vmatmul.mubr.f32.gmra.mrb[0].mxu0 %v60
  %v143 = vpop.f32.mrb[0].mxu0
  %v144 = vadd.f32 %v43, %v143
  %v145 = vpop.f32.mrb[0].mxu0
  %146 = vmatprep.mubr.f32.mxu0 0.0
  %147 = vmatmul.mubr.f32.gmra.mrb[0].mxu0 %v63
  %v148 = vpop.f32.mrb[0].mxu0
  %v149 = vadd.f32 %v48, %v148
  %v150 = vpop.f32.mrb[0].mxu0
  %151 = vmatprep.mubr.f32.mxu0 0.0
  %152 = vmatmul.mubr.f32.gmra.mrb[0].mxu0 %v66
  %v153 = vpop.f32.mrb[0].mxu0
  %v154 = vadd.f32 %v53, %v153
  %v155 = vpop.f32.mrb[0].mxu0
  %156 = vdwg.mxu0
  %v157 = vmax.f32 %v139, 0.0
  %v158 = vmax.f32 %v144, 0.0
  %v159 = vmax.f32 %v149, 0.0
  %v160 = vmax.f32 %v154, 0.0
  %v161 = vld [vmem:[%s3] sm:$0xff]
  %v162 = vld [vmem:[%s3 + $0x8] sm:$0xff]
  %v163 = vld [vmem:[%s3 + $0x10] sm:$0xff]
  %v164 = vld [vmem:[%s3 + $0x18] sm:$0xff]
  %v165 = vld [vmem:[%s4] sm:$0xff]
  %v166 = vld [vmem:[%s4 + $0x8] sm:$0xff]
  %v167 = vld [vmem:[%s4 + $0x10] sm:$0xff]
  %v168 = vld [vmem:[%s4 + $0x18] sm:$0xff]
  %170 = vset.pattern.permute.xlu0 0
  %171 = vperm.xlu0 %170, %v165
  %v172 = vpop.permute.xlu0 %171
  %175 = vset.pattern.permute.xlu0 0
  %176 = vperm.xlu0 %175, %v166
  %v177 = vpop.permute.xlu0 %176
  %180 = vset.pattern.permute.xlu0 0
  %181 = vperm.xlu0 %180, %v167
  %v182 = vpop.permute.xlu0 %181
  %185 = vset.pattern.permute.xlu0 0
  %186 = vperm.xlu0 %185, %v168
  %v187 = vpop.permute.xlu0 %186
  %vm189 = vcmask 261120
  %v191 = vsel %vm189, %v161, 0
  %v194 = vsel %vm189, %v162, 0
  %v197 = vsel %vm189, %v163, 0
  %v200 = vsel %vm189, %v164, 0
  %202 = vmatprep.subr.mxu0 0.0
  %203 = vmatpush1.msra.mxu0 %v157
  %204 = vmatprep.subr.mxu0 0.0
  %205 = vmatpush1.msra.mxu0 %v158
  %206 = vmatprep.subr.mxu0 0.0
  %207 = vmatpush1.msra.mxu0 %v159
  %208 = vmatprep.subr.mxu0 0.0
  %209 = vmatpush1.msra.mxu0 %v160
  %210 = vmatprep.subr.mxu0 0.0
  %211 = vmatpush1.msra.mxu0 0.0
  %212 = vmatprep.subr.mxu0 0.0
  %213 = vmatpush1.msra.mxu0 0.0
  %214 = vmatprep.subr.mxu0 0.0
  %215 = vmatpush1.msra.mxu0 0.0
  %216 = vmatprep.subr.mxu0 0.0
  %217 = vmatpush1.msra.mxu0 0.0
  %218 = vmatprep.subr.mxu0 0.0
  %219 = vmatpush1.msra.mxu0 0.0
  %220 = vmatprep.subr.mxu0 0.0
  %221 = vmatpush1.msra.mxu0 0.0
  %222 = vmatprep.subr.mxu0 0.0
  %223 = vmatpush1.msra.mxu0 0.0
  %224 = vmatprep.subr.mxu0 0.0
  %225 = vmatpush1.msra.mxu0 0.0
  %226 = vmatprep.subr.mxu0 0.0
  %227 = vmatpush1.msra.mxu0 0.0
  %228 = vmatprep.subr.mxu0 0.0
  %229 = vmatpush1.msra.mxu0 0.0
  %230 = vmatprep.subr.mxu0 0.0
  %231 = vmatpush1.msra.mxu0 0.0
  %232 = vmatprep.subr.mxu0 0.0
  %233 = vmatpush1.msra.mxu0 0.0
  %234 = vmatprep.subr.mxu0 0.0
  %235 = vmatpush1.msra.mxu0 0.0
  %236 = vmatprep.subr.mxu0 0.0
  %237 = vmatpush1.msra.mxu0 0.0
  %238 = vmatprep.subr.mxu0 0.0
  %239 = vmatpush1.msra.mxu0 0.0
  %240 = vmatprep.subr.mxu0 0.0
  %241 = vmatpush1.msra.mxu0 0.0
  %242 = vmatprep.subr.mxu0 0.0
  %243 = vmatpush1.msra.mxu0 0.0
  %244 = vmatprep.subr.mxu0 0.0
  %245 = vmatpush1.msra.mxu0 0.0
  %246 = vmatprep.subr.mxu0 0.0
  %247 = vmatpush1.msra.mxu0 0.0
  %248 = vmatprep.subr.mxu0 0.0
  %249 = vmatpush1.msra.mxu0 0.0
  %250 = vmatprep.subr.mxu0 0.0
  %251 = vmatpush1.msra.mxu0 0.0
  %252 = vmatprep.subr.mxu0 0.0
  %253 = vmatpush1.msra.mxu0 0.0
  %254 = vmatprep.subr.mxu0 0.0
  %255 = vmatpush1.msra.mxu0 0.0
  %256 = vmatprep.subr.mxu0 0.0
  %257 = vmatpush1.msra.mxu0 0.0
  %258 = vmatprep.subr.mxu0 0.0
  %259 = vmatpush1.msra.mxu0 0.0
  %260 = vmatprep.subr.mxu0 0.0
  %261 = vmatpush1.msra.mxu0 0.0
  %262 = vmatprep.subr.mxu0 0.0
  %263 = vmatpush1.msra.mxu0 0.0
  %264 = vmatprep.subr.mxu0 0.0
  %265 = vmatpush1.msra.mxu0 0.0
  %266 = vmatprep.mubr.f32.mxu0 0.0
  %267 = vmatmul.mubr.f32.gmra.mrb[0].mxu0 %v191
  %v268 = vpop.f32.mrb[0].mxu0
  %v269 = vadd.f32 %v172, %v268
  %v270 = vpop.f32.mrb[0].mxu0
  %271 = vmatprep.mubr.f32.mxu0 0.0
  %272 = vmatmul.mubr.f32.gmra.mrb[0].mxu0 %v194
  %v273 = vpop.f32.mrb[0].mxu0
  %v274 = vadd.f32 %v177, %v273
  %v275 = vpop.f32.mrb[0].mxu0
  %276 = vmatprep.mubr.f32.mxu0 0.0
  %277 = vmatmul.mubr.f32.gmra.mrb[0].mxu0 %v197
  %v278 = vpop.f32.mrb[0].mxu0
  %v279 = vadd.f32 %v182, %v278
  %v280 = vpop.f32.mrb[0].mxu0
  %281 = vmatprep.mubr.f32.mxu0 0.0
  %282 = vmatmul.mubr.f32.gmra.mrb[0].mxu0 %v200
  %v283 = vpop.f32.mrb[0].mxu0
  %v284 = vadd.f32 %v187, %v283
  %v285 = vpop.f32.mrb[0].mxu0
  %286 = vdwg.mxu0
  %v287 = vmax.f32 %v269, 0.0
  %v288 = vmax.f32 %v274, 0.0
  %v289 = vmax.f32 %v279, 0.0
  %v290 = vmax.f32 %v284, 0.0
  %s291 = scalar_lea.vmem %s3, 32
  %v292 = vld [vmem:[%s291] sm:$0xff]
  %v293 = vld [vmem:[%s291 + $0x8] sm:$0xff]
  %v294 = vld [vmem:[%s291 + $0x10] sm:$0xff]
  %v295 = vld [vmem:[%s291 + $0x18] sm:$0xff]
  %s296 = scalar_lea.vmem %s4, 32
  %v297 = vld [vmem:[%s296] sm:$0xff]
  %v298 = vld [vmem:[%s296 + $0x8] sm:$0xff]
  %v299 = vld [vmem:[%s296 + $0x10] sm:$0xff]
  %v300 = vld [vmem:[%s296 + $0x18] sm:$0xff]
  %302 = vset.pattern.permute.xlu0 0
  %303 = vperm.xlu0 %302, %v297
  %v304 = vpop.permute.xlu0 %303
  %307 = vset.pattern.permute.xlu0 0
  %308 = vperm.xlu0 %307, %v298
  %v309 = vpop.permute.xlu0 %308
  %312 = vset.pattern.permute.xlu0 0
  %313 = vperm.xlu0 %312, %v299
  %v314 = vpop.permute.xlu0 %313
  %317 = vset.pattern.permute.xlu0 0
  %318 = vperm.xlu0 %317, %v300
  %v319 = vpop.permute.xlu0 %318
  %v322 = vsel %vm189, %v292, 0
  %v325 = vsel %vm189, %v293, 0
  %v328 = vsel %vm189, %v294, 0
  %v331 = vsel %vm189, %v295, 0
  %333 = vmatprep.subr.mxu0 0.0
  %334 = vmatpush1.msra.mxu0 %v287
  %335 = vmatprep.subr.mxu0 0.0
  %336 = vmatpush1.msra.mxu0 %v288
  %337 = vmatprep.subr.mxu0 0.0
  %338 = vmatpush1.msra.mxu0 %v289
  %339 = vmatprep.subr.mxu0 0.0
  %340 = vmatpush1.msra.mxu0 %v290
  %341 = vmatprep.subr.mxu0 0.0
  %342 = vmatpush1.msra.mxu0 0.0
  %343 = vmatprep.subr.mxu0 0.0
  %344 = vmatpush1.msra.mxu0 0.0
  %345 = vmatprep.subr.mxu0 0.0
  %346 = vmatpush1.msra.mxu0 0.0
  %347 = vmatprep.subr.mxu0 0.0
  %348 = vmatpush1.msra.mxu0 0.0
  %349 = vmatprep.subr.mxu0 0.0
  %350 = vmatpush1.msra.mxu0 0.0
  %351 = vmatprep.subr.mxu0 0.0
  %352 = vmatpush1.msra.mxu0 0.0
  %353 = vmatprep.subr.mxu0 0.0
  %354 = vmatpush1.msra.mxu0 0.0
  %355 = vmatprep.subr.mxu0 0.0
  %356 = vmatpush1.msra.mxu0 0.0
  %357 = vmatprep.subr.mxu0 0.0
  %358 = vmatpush1.msra.mxu0 0.0
  %359 = vmatprep.subr.mxu0 0.0
  %360 = vmatpush1.msra.mxu0 0.0
  %361 = vmatprep.subr.mxu0 0.0
  %362 = vmatpush1.msra.mxu0 0.0
  %363 = vmatprep.subr.mxu0 0.0
  %364 = vmatpush1.msra.mxu0 0.0
  %365 = vmatprep.subr.mxu0 0.0
  %366 = vmatpush1.msra.mxu0 0.0
  %367 = vmatprep.subr.mxu0 0.0
  %368 = vmatpush1.msra.mxu0 0.0
  %369 = vmatprep.subr.mxu0 0.0
  %370 = vmatpush1.msra.mxu0 0.0
  %371 = vmatprep.subr.mxu0 0.0
  %372 = vmatpush1.msra.mxu0 0.0
  %373 = vmatprep.subr.mxu0 0.0
  %374 = vmatpush1.msra.mxu0 0.0
  %375 = vmatprep.subr.mxu0 0.0
  %376 = vmatpush1.msra.mxu0 0.0
  %377 = vmatprep.subr.mxu0 0.0
  %378 = vmatpush1.msra.mxu0 0.0
  %379 = vmatprep.subr.mxu0 0.0
  %380 = vmatpush1.msra.mxu0 0.0
  %381 = vmatprep.subr.mxu0 0.0
  %382 = vmatpush1.msra.mxu0 0.0
  %383 = vmatprep.subr.mxu0 0.0
  %384 = vmatpush1.msra.mxu0 0.0
  %385 = vmatprep.subr.mxu0 0.0
  %386 = vmatpush1.msra.mxu0 0.0
  %387 = vmatprep.subr.mxu0 0.0
  %388 = vmatpush1.msra.mxu0 0.0
  %389 = vmatprep.subr.mxu0 0.0
  %390 = vmatpush1.msra.mxu0 0.0
  %391 = vmatprep.subr.mxu0 0.0
  %392 = vmatpush1.msra.mxu0 0.0
  %393 = vmatprep.subr.mxu0 0.0
  %394 = vmatpush1.msra.mxu0 0.0
  %395 = vmatprep.subr.mxu0 0.0
  %396 = vmatpush1.msra.mxu0 0.0
  %397 = vmatprep.mubr.f32.mxu0 0.0
  %398 = vmatmul.mubr.f32.gmra.mrb[0].mxu0 %v322
  %v399 = vpop.f32.mrb[0].mxu0
  %v400 = vadd.f32 %v304, %v399
  %v401 = vpop.f32.mrb[0].mxu0
  %402 = vmatprep.mubr.f32.mxu0 0.0
  %403 = vmatmul.mubr.f32.gmra.mrb[0].mxu0 %v325
  %v404 = vpop.f32.mrb[0].mxu0
  %v405 = vadd.f32 %v309, %v404
  %v406 = vpop.f32.mrb[0].mxu0
  %407 = vmatprep.mubr.f32.mxu0 0.0
  %408 = vmatmul.mubr.f32.gmra.mrb[0].mxu0 %v328
  %v409 = vpop.f32.mrb[0].mxu0
  %v410 = vadd.f32 %v314, %v409
  %v411 = vpop.f32.mrb[0].mxu0
  %412 = vmatprep.mubr.f32.mxu0 0.0
  %413 = vmatmul.mubr.f32.gmra.mrb[0].mxu0 %v331
  %v414 = vpop.f32.mrb[0].mxu0
  %v415 = vadd.f32 %v319, %v414
  %v416 = vpop.f32.mrb[0].mxu0
  %417 = vdwg.mxu0
  %v418 = vadd.f32 %v400, %v157
  %v419 = vadd.f32 %v405, %v158
  %v420 = vadd.f32 %v410, %v159
  %v421 = vadd.f32 %v415, %v160
  %v422 = vmax.f32 %v418, 0.0
  %v423 = vmax.f32 %v419, 0.0
  %v424 = vmax.f32 %v420, 0.0
  %v425 = vmax.f32 %v421, 0.0
  %s426 = scalar_lea.vmem %s3, 64
  %v427 = vld [vmem:[%s426] sm:$0xff]
  %v428 = vld [vmem:[%s426 + $0x8] sm:$0xff]
  %v429 = vld [vmem:[%s426 + $0x10] sm:$0xff]
  %v430 = vld [vmem:[%s426 + $0x18] sm:$0xff]
  %s431 = scalar_lea.vmem %s4, 64
  %v432 = vld [vmem:[%s431] sm:$0xff]
  %v433 = vld [vmem:[%s431 + $0x8] sm:$0xff]
  %v434 = vld [vmem:[%s431 + $0x10] sm:$0xff]
  %v435 = vld [vmem:[%s431 + $0x18] sm:$0xff]
  %437 = vset.pattern.permute.xlu0 0
  %438 = vperm.xlu0 %437, %v432
  %v439 = vpop.permute.xlu0 %438
  %442 = vset.pattern.permute.xlu0 0
  %443 = vperm.xlu0 %442, %v433
  %v444 = vpop.permute.xlu0 %443
  %447 = vset.pattern.permute.xlu0 0
  %448 = vperm.xlu0 %447, %v434
  %v449 = vpop.permute.xlu0 %448
  %452 = vset.pattern.permute.xlu0 0
  %453 = vperm.xlu0 %452, %v435
  %v454 = vpop.permute.xlu0 %453
  %v457 = vsel %vm189, %v427, 0
  %v460 = vsel %vm189, %v428, 0
  %v463 = vsel %vm189, %v429, 0
  %v466 = vsel %vm189, %v430, 0
  %468 = vmatprep.subr.mxu0 0.0
  %469 = vmatpush1.msra.mxu0 %v422
  %470 = vmatprep.subr.mxu0 0.0
  %471 = vmatpush1.msra.mxu0 %v423
  %472 = vmatprep.subr.mxu0 0.0
  %473 = vmatpush1.msra.mxu0 %v424
  %474 = vmatprep.subr.mxu0 0.0
  %475 = vmatpush1.msra.mxu0 %v425
  %476 = vmatprep.subr.mxu0 0.0
  %477 = vmatpush1.msra.mxu0 0.0
  %478 = vmatprep.subr.mxu0 0.0
  %479 = vmatpush1.msra.mxu0 0.0
  %480 = vmatprep.subr.mxu0 0.0
  %481 = vmatpush1.msra.mxu0 0.0
  %482 = vmatprep.subr.mxu0 0.0
  %483 = vmatpush1.msra.mxu0 0.0
  %484 = vmatprep.subr.mxu0 0.0
  %485 = vmatpush1.msra.mxu0 0.0
  %486 = vmatprep.subr.mxu0 0.0
  %487 = vmatpush1.msra.mxu0 0.0
  %488 = vmatprep.subr.mxu0 0.0
  %489 = vmatpush1.msra.mxu0 0.0
  %490 = vmatprep.subr.mxu0 0.0
  %491 = vmatpush1.msra.mxu0 0.0
  %492 = vmatprep.subr.mxu0 0.0
  %493 = vmatpush1.msra.mxu0 0.0
  %494 = vmatprep.subr.mxu0 0.0
  %495 = vmatpush1.msra.mxu0 0.0
  %496 = vmatprep.subr.mxu0 0.0
  %497 = vmatpush1.msra.mxu0 0.0
  %498 = vmatprep.subr.mxu0 0.0
  %499 = vmatpush1.msra.mxu0 0.0
  %500 = vmatprep.subr.mxu0 0.0
  %501 = vmatpush1.msra.mxu0 0.0
  %502 = vmatprep.subr.mxu0 0.0
  %503 = vmatpush1.msra.mxu0 0.0
  %504 = vmatprep.subr.mxu0 0.0
  %505 = vmatpush1.msra.mxu0 0.0
  %506 = vmatprep.subr.mxu0 0.0
  %507 = vmatpush1.msra.mxu0 0.0
  %508 = vmatprep.subr.mxu0 0.0
  %509 = vmatpush1.msra.mxu0 0.0
  %510 = vmatprep.subr.mxu0 0.0
  %511 = vmatpush1.msra.mxu0 0.0
  %512 = vmatprep.subr.mxu0 0.0
  %513 = vmatpush1.msra.mxu0 0.0
  %514 = vmatprep.subr.mxu0 0.0
  %515 = vmatpush1.msra.mxu0 0.0
  %516 = vmatprep.subr.mxu0 0.0
  %517 = vmatpush1.msra.mxu0 0.0
  %518 = vmatprep.subr.mxu0 0.0
  %519 = vmatpush1.msra.mxu0 0.0
  %520 = vmatprep.subr.mxu0 0.0
  %521 = vmatpush1.msra.mxu0 0.0
  %522 = vmatprep.subr.mxu0 0.0
  %523 = vmatpush1.msra.mxu0 0.0
  %524 = vmatprep.subr.mxu0 0.0
  %525 = vmatpush1.msra.mxu0 0.0
  %526 = vmatprep.subr.mxu0 0.0
  %527 = vmatpush1.msra.mxu0 0.0
  %528 = vmatprep.subr.mxu0 0.0
  %529 = vmatpush1.msra.mxu0 0.0
  %530 = vmatprep.subr.mxu0 0.0
  %531 = vmatpush1.msra.mxu0 0.0
  %532 = vmatprep.mubr.f32.mxu0 0.0
  %533 = vmatmul.mubr.f32.gmra.mrb[0].mxu0 %v457
  %v534 = vpop.f32.mrb[0].mxu0
  %v535 = vadd.f32 %v439, %v534
  %v536 = vpop.f32.mrb[0].mxu0
  %537 = vmatprep.mubr.f32.mxu0 0.0
  %538 = vmatmul.mubr.f32.gmra.mrb[0].mxu0 %v460
  %v539 = vpop.f32.mrb[0].mxu0
  %v540 = vadd.f32 %v444, %v539
  %v541 = vpop.f32.mrb[0].mxu0
  %542 = vmatprep.mubr.f32.mxu0 0.0
  %543 = vmatmul.mubr.f32.gmra.mrb[0].mxu0 %v463
  %v544 = vpop.f32.mrb[0].mxu0
  %v545 = vadd.f32 %v449, %v544
  %v546 = vpop.f32.mrb[0].mxu0
  %547 = vmatprep.mubr.f32.mxu0 0.0
  %548 = vmatmul.mubr.f32.gmra.mrb[0].mxu0 %v466
  %v549 = vpop.f32.mrb[0].mxu0
  %v550 = vadd.f32 %v454, %v549
  %v551 = vpop.f32.mrb[0].mxu0
  %552 = vdwg.mxu0
  %v553 = vmax.f32 %v535, 0.0
  %v554 = vmax.f32 %v540, 0.0
  %v555 = vmax.f32 %v545, 0.0
  %v556 = vmax.f32 %v550, 0.0
  %s557 = scalar_lea.vmem %s3, 96
  %v558 = vld [vmem:[%s557] sm:$0xff]
  %v559 = vld [vmem:[%s557 + $0x8] sm:$0xff]
  %v560 = vld [vmem:[%s557 + $0x10] sm:$0xff]
  %v561 = vld [vmem:[%s557 + $0x18] sm:$0xff]
  %s562 = scalar_lea.vmem %s4, 96
  %v563 = vld [vmem:[%s562] sm:$0xff]
  %v564 = vld [vmem:[%s562 + $0x8] sm:$0xff]
  %v565 = vld [vmem:[%s562 + $0x10] sm:$0xff]
  %v566 = vld [vmem:[%s562 + $0x18] sm:$0xff]
  %568 = vset.pattern.permute.xlu0 0
  %569 = vperm.xlu0 %568, %v563
  %v570 = vpop.permute.xlu0 %569
  %573 = vset.pattern.permute.xlu0 0
  %574 = vperm.xlu0 %573, %v564
  %v575 = vpop.permute.xlu0 %574
  %578 = vset.pattern.permute.xlu0 0
  %579 = vperm.xlu0 %578, %v565
  %v580 = vpop.permute.xlu0 %579
  %583 = vset.pattern.permute.xlu0 0
  %584 = vperm.xlu0 %583, %v566
  %v585 = vpop.permute.xlu0 %584
  %v588 = vsel %vm189, %v558, 0
  %v591 = vsel %vm189, %v559, 0
  %v594 = vsel %vm189, %v560, 0
  %v597 = vsel %vm189, %v561, 0
  %599 = vmatprep.subr.mxu0 0.0
  %600 = vmatpush1.msra.mxu0 %v553
  %601 = vmatprep.subr.mxu0 0.0
  %602 = vmatpush1.msra.mxu0 %v554
  %603 = vmatprep.subr.mxu0 0.0
  %604 = vmatpush1.msra.mxu0 %v555
  %605 = vmatprep.subr.mxu0 0.0
  %606 = vmatpush1.msra.mxu0 %v556
  %607 = vmatprep.subr.mxu0 0.0
  %608 = vmatpush1.msra.mxu0 0.0
  %609 = vmatprep.subr.mxu0 0.0
  %610 = vmatpush1.msra.mxu0 0.0
  %611 = vmatprep.subr.mxu0 0.0
  %612 = vmatpush1.msra.mxu0 0.0
  %613 = vmatprep.subr.mxu0 0.0
  %614 = vmatpush1.msra.mxu0 0.0
  %615 = vmatprep.subr.mxu0 0.0
  %616 = vmatpush1.msra.mxu0 0.0
  %617 = vmatprep.subr.mxu0 0.0
  %618 = vmatpush1.msra.mxu0 0.0
  %619 = vmatprep.subr.mxu0 0.0
  %620 = vmatpush1.msra.mxu0 0.0
  %621 = vmatprep.subr.mxu0 0.0
  %622 = vmatpush1.msra.mxu0 0.0
  %623 = vmatprep.subr.mxu0 0.0
  %624 = vmatpush1.msra.mxu0 0.0
  %625 = vmatprep.subr.mxu0 0.0
  %626 = vmatpush1.msra.mxu0 0.0
  %627 = vmatprep.subr.mxu0 0.0
  %628 = vmatpush1.msra.mxu0 0.0
  %629 = vmatprep.subr.mxu0 0.0
  %630 = vmatpush1.msra.mxu0 0.0
  %631 = vmatprep.subr.mxu0 0.0
  %632 = vmatpush1.msra.mxu0 0.0
  %633 = vmatprep.subr.mxu0 0.0
  %634 = vmatpush1.msra.mxu0 0.0
  %635 = vmatprep.subr.mxu0 0.0
  %636 = vmatpush1.msra.mxu0 0.0
  %637 = vmatprep.subr.mxu0 0.0
  %638 = vmatpush1.msra.mxu0 0.0
  %639 = vmatprep.subr.mxu0 0.0
  %640 = vmatpush1.msra.mxu0 0.0
  %641 = vmatprep.subr.mxu0 0.0
  %642 = vmatpush1.msra.mxu0 0.0
  %643 = vmatprep.subr.mxu0 0.0
  %644 = vmatpush1.msra.mxu0 0.0
  %645 = vmatprep.subr.mxu0 0.0
  %646 = vmatpush1.msra.mxu0 0.0
  %647 = vmatprep.subr.mxu0 0.0
  %648 = vmatpush1.msra.mxu0 0.0
  %649 = vmatprep.subr.mxu0 0.0
  %650 = vmatpush1.msra.mxu0 0.0
  %651 = vmatprep.subr.mxu0 0.0
  %652 = vmatpush1.msra.mxu0 0.0
  %653 = vmatprep.subr.mxu0 0.0
  %654 = vmatpush1.msra.mxu0 0.0
  %655 = vmatprep.subr.mxu0 0.0
  %656 = vmatpush1.msra.mxu0 0.0
  %657 = vmatprep.subr.mxu0 0.0
  %658 = vmatpush1.msra.mxu0 0.0
  %659 = vmatprep.subr.mxu0 0.0
  %660 = vmatpush1.msra.mxu0 0.0
  %661 = vmatprep.subr.mxu0 0.0
  %662 = vmatpush1.msra.mxu0 0.0
  %663 = vmatprep.mubr.f32.mxu0 0.0
  %664 = vmatmul.mubr.f32.gmra.mrb[0].mxu0 %v588
  %v665 = vpop.f32.mrb[0].mxu0
  %v666 = vadd.f32 %v570, %v665
  %v667 = vpop.f32.mrb[0].mxu0
  %668 = vmatprep.mubr.f32.mxu0 0.0
  %669 = vmatmul.mubr.f32.gmra.mrb[0].mxu0 %v591
  %v670 = vpop.f32.mrb[0].mxu0
  %v671 = vadd.f32 %v575, %v670
  %v672 = vpop.f32.mrb[0].mxu0
  %673 = vmatprep.mubr.f32.mxu0 0.0
  %674 = vmatmul.mubr.f32.gmra.mrb[0].mxu0 %v594
  %v675 = vpop.f32.mrb[0].mxu0
  %v676 = vadd.f32 %v580, %v675
  %v677 = vpop.f32.mrb[0].mxu0
  %678 = vmatprep.mubr.f32.mxu0 0.0
  %679 = vmatmul.mubr.f32.gmra.mrb[0].mxu0 %v597
  %v680 = vpop.f32.mrb[0].mxu0
  %v681 = vadd.f32 %v585, %v680
  %v682 = vpop.f32.mrb[0].mxu0
  %683 = vdwg.mxu0
  %v684 = vadd.f32 %v666, %v422
  %v685 = vadd.f32 %v671, %v423
  %v686 = vadd.f32 %v676, %v424
  %v687 = vadd.f32 %v681, %v425
  %v688 = vmax.f32 %v684, 0.0
  %v689 = vmax.f32 %v685, 0.0
  %v690 = vmax.f32 %v686, 0.0
  %v691 = vmax.f32 %v687, 0.0
  %s692 = scalar_lea.vmem %s3, 128
  %v693 = vld [vmem:[%s692] sm:$0xff]
  %v694 = vld [vmem:[%s692 + $0x8] sm:$0xff]
  %v695 = vld [vmem:[%s692 + $0x10] sm:$0xff]
  %v696 = vld [vmem:[%s692 + $0x18] sm:$0xff]
  %s697 = scalar_lea.vmem %s4, 128
  %v698 = vld [vmem:[%s697] sm:$0xff]
  %v699 = vld [vmem:[%s697 + $0x8] sm:$0xff]
  %v700 = vld [vmem:[%s697 + $0x10] sm:$0xff]
  %v701 = vld [vmem:[%s697 + $0x18] sm:$0xff]
  %703 = vset.pattern.permute.xlu0 0
  %704 = vperm.xlu0 %703, %v698
  %v705 = vpop.permute.xlu0 %704
  %708 = vset.pattern.permute.xlu0 0
  %709 = vperm.xlu0 %708, %v699
  %v710 = vpop.permute.xlu0 %709
  %713 = vset.pattern.permute.xlu0 0
  %714 = vperm.xlu0 %713, %v700
  %v715 = vpop.permute.xlu0 %714
  %718 = vset.pattern.permute.xlu0 0
  %719 = vperm.xlu0 %718, %v701
  %v720 = vpop.permute.xlu0 %719
  %v723 = vsel %vm189, %v693, 0
  %v726 = vsel %vm189, %v694, 0
  %v729 = vsel %vm189, %v695, 0
  %v732 = vsel %vm189, %v696, 0
  %734 = vmatprep.subr.mxu0 0.0
  %735 = vmatpush1.msra.mxu0 %v688
  %736 = vmatprep.subr.mxu0 0.0
  %737 = vmatpush1.msra.mxu0 %v689
  %738 = vmatprep.subr.mxu0 0.0
  %739 = vmatpush1.msra.mxu0 %v690
  %740 = vmatprep.subr.mxu0 0.0
  %741 = vmatpush1.msra.mxu0 %v691
  %742 = vmatprep.subr.mxu0 0.0
  %743 = vmatpush1.msra.mxu0 0.0
  %744 = vmatprep.subr.mxu0 0.0
  %745 = vmatpush1.msra.mxu0 0.0
  %746 = vmatprep.subr.mxu0 0.0
  %747 = vmatpush1.msra.mxu0 0.0
  %748 = vmatprep.subr.mxu0 0.0
  %749 = vmatpush1.msra.mxu0 0.0
  %750 = vmatprep.subr.mxu0 0.0
  %751 = vmatpush1.msra.mxu0 0.0
  %752 = vmatprep.subr.mxu0 0.0
  %753 = vmatpush1.msra.mxu0 0.0
  %754 = vmatprep.subr.mxu0 0.0
  %755 = vmatpush1.msra.mxu0 0.0
  %756 = vmatprep.subr.mxu0 0.0
  %757 = vmatpush1.msra.mxu0 0.0
  %758 = vmatprep.subr.mxu0 0.0
  %759 = vmatpush1.msra.mxu0 0.0
  %760 = vmatprep.subr.mxu0 0.0
  %761 = vmatpush1.msra.mxu0 0.0
  %762 = vmatprep.subr.mxu0 0.0
  %763 = vmatpush1.msra.mxu0 0.0
  %764 = vmatprep.subr.mxu0 0.0
  %765 = vmatpush1.msra.mxu0 0.0
  %766 = vmatprep.subr.mxu0 0.0
  %767 = vmatpush1.msra.mxu0 0.0
  %768 = vmatprep.subr.mxu0 0.0
  %769 = vmatpush1.msra.mxu0 0.0
  %770 = vmatprep.subr.mxu0 0.0
  %771 = vmatpush1.msra.mxu0 0.0
  %772 = vmatprep.subr.mxu0 0.0
  %773 = vmatpush1.msra.mxu0 0.0
  %774 = vmatprep.subr.mxu0 0.0
  %775 = vmatpush1.msra.mxu0 0.0
  %776 = vmatprep.subr.mxu0 0.0
  %777 = vmatpush1.msra.mxu0 0.0
  %778 = vmatprep.subr.mxu0 0.0
  %779 = vmatpush1.msra.mxu0 0.0
  %780 = vmatprep.subr.mxu0 0.0
  %781 = vmatpush1.msra.mxu0 0.0
  %782 = vmatprep.subr.mxu0 0.0
  %783 = vmatpush1.msra.mxu0 0.0
  %784 = vmatprep.subr.mxu0 0.0
  %785 = vmatpush1.msra.mxu0 0.0
  %786 = vmatprep.subr.mxu0 0.0
  %787 = vmatpush1.msra.mxu0 0.0
  %788 = vmatprep.subr.mxu0 0.0
  %789 = vmatpush1.msra.mxu0 0.0
  %790 = vmatprep.subr.mxu0 0.0
  %791 = vmatpush1.msra.mxu0 0.0
  %792 = vmatprep.subr.mxu0 0.0
  %793 = vmatpush1.msra.mxu0 0.0
  %794 = vmatprep.subr.mxu0 0.0
  %795 = vmatpush1.msra.mxu0 0.0
  %796 = vmatprep.subr.mxu0 0.0
  %797 = vmatpush1.msra.mxu0 0.0
  %798 = vmatprep.mubr.f32.mxu0 0.0
  %799 = vmatmul.mubr.f32.gmra.mrb[0].mxu0 %v723
  %v800 = vpop.f32.mrb[0].mxu0
  %v801 = vadd.f32 %v705, %v800
  %v802 = vpop.f32.mrb[0].mxu0
  %803 = vmatprep.mubr.f32.mxu0 0.0
  %804 = vmatmul.mubr.f32.gmra.mrb[0].mxu0 %v726
  %v805 = vpop.f32.mrb[0].mxu0
  %v806 = vadd.f32 %v710, %v805
  %v807 = vpop.f32.mrb[0].mxu0
  %808 = vmatprep.mubr.f32.mxu0 0.0
  %809 = vmatmul.mubr.f32.gmra.mrb[0].mxu0 %v729
  %v810 = vpop.f32.mrb[0].mxu0
  %v811 = vadd.f32 %v715, %v810
  %v812 = vpop.f32.mrb[0].mxu0
  %813 = vmatprep.mubr.f32.mxu0 0.0
  %814 = vmatmul.mubr.f32.gmra.mrb[0].mxu0 %v732
  %v815 = vpop.f32.mrb[0].mxu0
  %v816 = vadd.f32 %v720, %v815
  %v817 = vpop.f32.mrb[0].mxu0
  %818 = vdwg.mxu0
  %v819 = vmax.f32 %v801, 0.0
  %v820 = vmax.f32 %v806, 0.0
  %v821 = vmax.f32 %v811, 0.0
  %v822 = vmax.f32 %v816, 0.0
  %s823 = scalar_lea.vmem %s3, 160
  %v824 = vld [vmem:[%s823] sm:$0xff]
  %v825 = vld [vmem:[%s823 + $0x8] sm:$0xff]
  %v826 = vld [vmem:[%s823 + $0x10] sm:$0xff]
  %v827 = vld [vmem:[%s823 + $0x18] sm:$0xff]
  %s828 = scalar_lea.vmem %s4, 160
  %v829 = vld [vmem:[%s828] sm:$0xff]
  %v830 = vld [vmem:[%s828 + $0x8] sm:$0xff]
  %v831 = vld [vmem:[%s828 + $0x10] sm:$0xff]
  %v832 = vld [vmem:[%s828 + $0x18] sm:$0xff]
  %834 = vset.pattern.permute.xlu0 0
  %835 = vperm.xlu0 %834, %v829
  %v836 = vpop.permute.xlu0 %835
  %839 = vset.pattern.permute.xlu0 0
  %840 = vperm.xlu0 %839, %v830
  %v841 = vpop.permute.xlu0 %840
  %844 = vset.pattern.permute.xlu0 0
  %845 = vperm.xlu0 %844, %v831
  %v846 = vpop.permute.xlu0 %845
  %849 = vset.pattern.permute.xlu0 0
  %850 = vperm.xlu0 %849, %v832
  %v851 = vpop.permute.xlu0 %850
  %v854 = vsel %vm189, %v824, 0
  %v857 = vsel %vm189, %v825, 0
  %v860 = vsel %vm189, %v826, 0
  %v863 = vsel %vm189, %v827, 0
  %865 = vmatprep.subr.mxu0 0.0
  %866 = vmatpush1.msra.mxu0 %v819
  %867 = vmatprep.subr.mxu0 0.0
  %868 = vmatpush1.msra.mxu0 %v820
  %869 = vmatprep.subr.mxu0 0.0
  %870 = vmatpush1.msra.mxu0 %v821
  %871 = vmatprep.subr.mxu0 0.0
  %872 = vmatpush1.msra.mxu0 %v822
  %873 = vmatprep.subr.mxu0 0.0
  %874 = vmatpush1.msra.mxu0 0.0
  %875 = vmatprep.subr.mxu0 0.0
  %876 = vmatpush1.msra.mxu0 0.0
  %877 = vmatprep.subr.mxu0 0.0
  %878 = vmatpush1.msra.mxu0 0.0
  %879 = vmatprep.subr.mxu0 0.0
  %880 = vmatpush1.msra.mxu0 0.0
  %881 = vmatprep.subr.mxu0 0.0
  %882 = vmatpush1.msra.mxu0 0.0
  %883 = vmatprep.subr.mxu0 0.0
  %884 = vmatpush1.msra.mxu0 0.0
  %885 = vmatprep.subr.mxu0 0.0
  %886 = vmatpush1.msra.mxu0 0.0
  %887 = vmatprep.subr.mxu0 0.0
  %888 = vmatpush1.msra.mxu0 0.0
  %889 = vmatprep.subr.mxu0 0.0
  %890 = vmatpush1.msra.mxu0 0.0
  %891 = vmatprep.subr.mxu0 0.0
  %892 = vmatpush1.msra.mxu0 0.0
  %893 = vmatprep.subr.mxu0 0.0
  %894 = vmatpush1.msra.mxu0 0.0
  %895 = vmatprep.subr.mxu0 0.0
  %896 = vmatpush1.msra.mxu0 0.0
  %897 = vmatprep.subr.mxu0 0.0
  %898 = vmatpush1.msra.mxu0 0.0
  %899 = vmatprep.subr.mxu0 0.0
  %900 = vmatpush1.msra.mxu0 0.0
  %901 = vmatprep.subr.mxu0 0.0
  %902 = vmatpush1.msra.mxu0 0.0
  %903 = vmatprep.subr.mxu0 0.0
  %904 = vmatpush1.msra.mxu0 0.0
  %905 = vmatprep.subr.mxu0 0.0
  %906 = vmatpush1.msra.mxu0 0.0
  %907 = vmatprep.subr.mxu0 0.0
  %908 = vmatpush1.msra.mxu0 0.0
  %909 = vmatprep.subr.mxu0 0.0
  %910 = vmatpush1.msra.mxu0 0.0
  %911 = vmatprep.subr.mxu0 0.0
  %912 = vmatpush1.msra.mxu0 0.0
  %913 = vmatprep.subr.mxu0 0.0
  %914 = vmatpush1.msra.mxu0 0.0
  %915 = vmatprep.subr.mxu0 0.0
  %916 = vmatpush1.msra.mxu0 0.0
  %917 = vmatprep.subr.mxu0 0.0
  %918 = vmatpush1.msra.mxu0 0.0
  %919 = vmatprep.subr.mxu0 0.0
  %920 = vmatpush1.msra.mxu0 0.0
  %921 = vmatprep.subr.mxu0 0.0
  %922 = vmatpush1.msra.mxu0 0.0
  %923 = vmatprep.subr.mxu0 0.0
  %924 = vmatpush1.msra.mxu0 0.0
  %925 = vmatprep.subr.mxu0 0.0
  %926 = vmatpush1.msra.mxu0 0.0
  %927 = vmatprep.subr.mxu0 0.0
  %928 = vmatpush1.msra.mxu0 0.0
  %929 = vmatprep.mubr.f32.mxu0 0.0
  %930 = vmatmul.mubr.f32.gmra.mrb[0].mxu0 %v854
  %v931 = vpop.f32.mrb[0].mxu0
  %v932 = vadd.f32 %v836, %v931
  %v933 = vpop.f32.mrb[0].mxu0
  %934 = vmatprep.mubr.f32.mxu0 0.0
  %935 = vmatmul.mubr.f32.gmra.mrb[0].mxu0 %v857
  %v936 = vpop.f32.mrb[0].mxu0
  %v937 = vadd.f32 %v841, %v936
  %v938 = vpop.f32.mrb[0].mxu0
  %939 = vmatprep.mubr.f32.mxu0 0.0
  %940 = vmatmul.mubr.f32.gmra.mrb[0].mxu0 %v860
  %v941 = vpop.f32.mrb[0].mxu0
  %v942 = vadd.f32 %v846, %v941
  %v943 = vpop.f32.mrb[0].mxu0
  %944 = vmatprep.mubr.f32.mxu0 0.0
  %945 = vmatmul.mubr.f32.gmra.mrb[0].mxu0 %v863
  %v946 = vpop.f32.mrb[0].mxu0
  %v947 = vadd.f32 %v851, %v946
  %v948 = vpop.f32.mrb[0].mxu0
  %949 = vdwg.mxu0
  %v950 = vadd.f32 %v932, %v688
  %v951 = vadd.f32 %v937, %v689
  %v952 = vadd.f32 %v942, %v690
  %v953 = vadd.f32 %v947, %v691
  %v954 = vmax.f32 %v950, 0.0
  %v955 = vmax.f32 %v951, 0.0
  %v956 = vmax.f32 %v952, 0.0
  %v957 = vmax.f32 %v953, 0.0
  %v958 = vld [vmem:[%s5] sm:$0xf]
  %v959 = vld [vmem:[%s6] sm:$0xf]
  %961 = vset.pattern.permute.xlu0 0
  %962 = vperm.xlu0 %961, %v959
  %v963 = vpop.permute.xlu0 %962
  %v966 = vsel %vm189, %v958, 0
  %968 = vmatprep.subr.mxu0 0.0
  %969 = vmatpush1.msra.mxu0 %v954
  %970 = vmatprep.subr.mxu0 0.0
  %971 = vmatpush1.msra.mxu0 %v955
  %972 = vmatprep.subr.mxu0 0.0
  %973 = vmatpush1.msra.mxu0 %v956
  %974 = vmatprep.subr.mxu0 0.0
  %975 = vmatpush1.msra.mxu0 %v957
  %976 = vmatprep.subr.mxu0 0.0
  %977 = vmatpush1.msra.mxu0 0.0
  %978 = vmatprep.subr.mxu0 0.0
  %979 = vmatpush1.msra.mxu0 0.0
  %980 = vmatprep.subr.mxu0 0.0
  %981 = vmatpush1.msra.mxu0 0.0
  %982 = vmatprep.subr.mxu0 0.0
  %983 = vmatpush1.msra.mxu0 0.0
  %984 = vmatprep.subr.mxu0 0.0
  %985 = vmatpush1.msra.mxu0 0.0
  %986 = vmatprep.subr.mxu0 0.0
  %987 = vmatpush1.msra.mxu0 0.0
  %988 = vmatprep.subr.mxu0 0.0
  %989 = vmatpush1.msra.mxu0 0.0
  %990 = vmatprep.subr.mxu0 0.0
  %991 = vmatpush1.msra.mxu0 0.0
  %992 = vmatprep.subr.mxu0 0.0
  %993 = vmatpush1.msra.mxu0 0.0
  %994 = vmatprep.subr.mxu0 0.0
  %995 = vmatpush1.msra.mxu0 0.0
  %996 = vmatprep.subr.mxu0 0.0
  %997 = vmatpush1.msra.mxu0 0.0
  %998 = vmatprep.subr.mxu0 0.0
  %999 = vmatpush1.msra.mxu0 0.0
  %1000 = vmatprep.subr.mxu0 0.0
  %1001 = vmatpush1.msra.mxu0 0.0
  %1002 = vmatprep.subr.mxu0 0.0
  %1003 = vmatpush1.msra.mxu0 0.0
  %1004 = vmatprep.subr.mxu0 0.0
  %1005 = vmatpush1.msra.mxu0 0.0
  %1006 = vmatprep.subr.mxu0 0.0
  %1007 = vmatpush1.msra.mxu0 0.0
  %1008 = vmatprep.subr.mxu0 0.0
  %1009 = vmatpush1.msra.mxu0 0.0
  %1010 = vmatprep.subr.mxu0 0.0
  %1011 = vmatpush1.msra.mxu0 0.0
  %1012 = vmatprep.subr.mxu0 0.0
  %1013 = vmatpush1.msra.mxu0 0.0
  %1014 = vmatprep.subr.mxu0 0.0
  %1015 = vmatpush1.msra.mxu0 0.0
  %1016 = vmatprep.subr.mxu0 0.0
  %1017 = vmatpush1.msra.mxu0 0.0
  %1018 = vmatprep.subr.mxu0 0.0
  %1019 = vmatpush1.msra.mxu0 0.0
  %1020 = vmatprep.subr.mxu0 0.0
  %1021 = vmatpush1.msra.mxu0 0.0
  %1022 = vmatprep.subr.mxu0 0.0
  %1023 = vmatpush1.msra.mxu0 0.0
  %1024 = vmatprep.subr.mxu0 0.0
  %1025 = vmatpush1.msra.mxu0 0.0
  %1026 = vmatprep.subr.mxu0 0.0
  %1027 = vmatpush1.msra.mxu0 0.0
  %1028 = vmatprep.subr.mxu0 0.0
  %1029 = vmatpush1.msra.mxu0 0.0
  %1030 = vmatprep.subr.mxu0 0.0
  %1031 = vmatpush1.msra.mxu0 0.0
  %1032 = vmatprep.mubr.f32.mxu0 0.0
  %1033 = vmatmul.mubr.f32.gmra.mrb[0].mxu0 %v966
  %v1034 = vpop.f32.mrb[0].mxu0
  %v1035 = vadd.f32 %v963, %v1034
  %v1036 = vpop.f32.mrb[0].mxu0
  %1037 = vdwg.mxu0
  %vm1038 = vcmask 11264
  %1039 = vst.msk [vmem:[%s7] sm:$0xf] %vm1038, %v1035
  // Predicated region
  $region30: #{tpu_custom_call.1} parent=0 // pred_check
    _
  $region31: #{tpu_custom_call.1} parent=0 // pred_check_branch
    %1041 = sbr.rel (0) target = $region33
  $region32: #{tpu_custom_call.1} parent=0 // pred_region
    _
  $region33: #{tpu_custom_call.1} parent=0 // pred_fallthru
    _
  // Predicated region
  $region34: #{tpu_custom_call.1} parent=0 // pred_check
    _
  $region35: #{tpu_custom_call.1} parent=0 // pred_check_branch
    %1043 = sbr.rel (0) target = $region37
  $region36: #{tpu_custom_call.1} parent=0 // pred_region
    _
  $region37: #{tpu_custom_call.1} parent=0 // pred_fallthru
    _

</llo_original>
